<compile_context>
chip_gen: v7x
topology: tpu7x:2x2x1
jax: 0.10.0
libtpu: 0.0.40
codegen_flags: <defaults>
</compile_context>

<pallas_src>
import math

import jax
import jax.numpy as jnp
import numpy as np
from jax.experimental import pallas as pl
from jax.experimental.pallas import tpu as pltpu

_LOG_2PI = math.log(2.0 * math.pi)  # total 2-D Gaussian normalization term


def _mdn_neg_kernel(mu_x_ref, mu_y_ref, isg_x_ref, isg_y_ref, lognorm_ref,
                    pos_x_ref, pos_y_ref, neg_x_ref, neg_y_ref, out_ref):
    """MDN negative loss for a block of BB batch elements.

    Ref shapes (BB = batch block):
      mu_x/mu_y/isg_x/isg_y/lognorm : (BB, W, K)
      pos_x/pos_y                   : (BB, W, M)
      neg_x/neg_y                   : (BB, 1, N)
      out                           : (BB, 1)
    """
    W = pos_x_ref.shape[1]
    M = pos_x_ref.shape[2]
    K = mu_x_ref.shape[2]

    neg_x = neg_x_ref[...]                          # (BB, 1, N)
    neg_y = neg_y_ref[...]
    pos_x = pos_x_ref[...]                          # (BB, W, M)
    pos_y = pos_y_ref[...]

    # ---- min *squared* distance of each negative to any positive, per waypoint.
    #      M is tiny & compile-time -> unrolled accumulation, N stays on lanes.
    def sq_dist(m):
        dx = pos_x[:, :, m:m + 1] - neg_x           # (BB,W,1)-(BB,1,N) -> (BB,W,N)
        dy = pos_y[:, :, m:m + 1] - neg_y
        return dx * dx + dy * dy

    min_d2 = sq_dist(0)
    for m in range(1, M):
        min_d2 = jnp.minimum(min_d2, sq_dist(m))
    min_dist = jnp.sqrt(min_d2)                     # single sqrt on (BB, W, N)

    # ---- softmin over negatives (softmax of the negated min distances)
    nm = -min_dist
    nm_max = jnp.max(nm, axis=-1, keepdims=True)    # (BB, W, 1)
    e = jnp.exp(nm - nm_max)
    sum_e = jnp.sum(e, axis=-1, keepdims=True)
    inv = pl.reciprocal(sum_e, approx=True)
    inv = inv * (2.0 - sum_e * inv)                 # one Newton step -> ~f32 exact
    weights = e * inv                               # (BB, W, N)

    # ---- mixture-of-Gaussians log-prob: logsumexp over K components.
    #      K is tiny & compile-time; two unrolled passes (max, then sum) keep
    #      vreg pressure O(1) in K.
    mu_x = mu_x_ref[...]
    mu_y = mu_y_ref[...]
    isg_x = isg_x_ref[...]
    isg_y = isg_y_ref[...]
    lognorm = lognorm_ref[...]   # log_softmax(pi) - log(sg_x) - log(sg_y) - log(2*pi)

    def comp_logp(k):
        zx = (neg_x - mu_x[:, :, k:k + 1]) * isg_x[:, :, k:k + 1]   # (BB, W, N)
        zy = (neg_y - mu_y[:, :, k:k + 1]) * isg_y[:, :, k:k + 1]
        return lognorm[:, :, k:k + 1] - 0.5 * (zx * zx + zy * zy)

    s_max = comp_logp(0)
    for k in range(1, K):
        s_max = jnp.maximum(s_max, comp_logp(k))
    acc = jnp.exp(comp_logp(0) - s_max)
    for k in range(1, K):
        acc = acc + jnp.exp(comp_logp(k) - s_max)
    log_prob = jnp.log(acc) + s_max                 # (BB, W, N)

    # ---- loss_b = -(1/W) * sum_{w,n} log_prob * softmin_weight
    wsum = jnp.sum(log_prob * weights, axis=-1, keepdims=True)   # (BB, W, 1)
    out_ref[...] = -jnp.sum(wsum, axis=1) * (1.0 / W)            # (BB, 1)


def mdn_loss_negative(mu, sigma, pi, negative_targets, target_is_wh,
                      positive_targets, waypoints_ix, num_negatives_cap=-1,
                      block_b=8):
    """JAX/Pallas equivalent of MDNLossNegative.forward (positive-targets path)."""
    if positive_targets is None:
        # TODO(synk): reference else-branch calls `.unsuqeeze` (typo) and cannot run in PyTorch.
        raise NotImplementedError("positive_targets=None path not implemented")
    num_negatives = negative_targets.shape[1]
    if 0 < num_negatives_cap < num_negatives:
        # TODO(synk): per-waypoint top-k negative capping (data-dependent gather) not implemented.
        raise NotImplementedError("num_negatives_cap path not implemented")

    mu = jnp.asarray(mu, jnp.float32)
    sigma = jnp.asarray(sigma, jnp.float32)
    pi = jnp.asarray(pi, jnp.float32)
    negative_targets = jnp.asarray(negative_targets, jnp.float32)
    positive_targets = jnp.asarray(positive_targets, jnp.float32)

    if target_is_wh:
        negative_targets = jnp.flip(negative_targets, axis=-1)
        positive_targets = jnp.flip(positive_targets, axis=-1)

    # --- wrapper-side layout plumbing + precompute (all vectorized over B in XLA) ---
    pos = positive_targets[:, :, jnp.asarray(waypoints_ix), :]   # (B, M, W, 2)
    pos_x = jnp.transpose(pos[..., 0], (0, 2, 1))                # (B, W, M)
    pos_y = jnp.transpose(pos[..., 1], (0, 2, 1))
    neg_x = negative_targets[..., 0][:, None, :]                 # (B, 1, N)
    neg_y = negative_targets[..., 1][:, None, :]

    mu_x, mu_y = mu[..., 0], mu[..., 1]                          # (B, W, K)
    sg_x, sg_y = sigma[..., 0], sigma[..., 1]
    isg_x = 1.0 / sg_x
    isg_y = 1.0 / sg_y
    lognorm = (jax.nn.log_softmax(pi, axis=-1)
               - jnp.log(sg_x) - jnp.log(sg_y) - _LOG_2PI)       # (B, W, K)

    B, W, K = mu_x.shape
    M = pos_x.shape[2]
    N = neg_x.shape[2]

    # --- batch blocking (amortize per-grid-step overhead) ---
    if B <= block_b:
        BB = B                                     # single block, no padding
    else:
        BB = max(8, (block_b // 8) * 8)            # sublane-aligned multi-block
    Bp = ((B + BB - 1) // BB) * BB
    pad = Bp - B
    if pad:
        def _pad(a):
            return jnp.pad(a, ((0, pad),) + ((0, 0),) * (a.ndim - 1))
        (mu_x, mu_y, isg_x, isg_y, lognorm,
         pos_x, pos_y, neg_x, neg_y) = map(
            _pad, (mu_x, mu_y, isg_x, isg_y, lognorm,
                   pos_x, pos_y, neg_x, neg_y))

    def spec3(d1, d2):
        return pl.BlockSpec((BB, d1, d2), lambda b: (b, 0, 0))

    out = pl.pallas_call(
        _mdn_neg_kernel,
        out_shape=jax.ShapeDtypeStruct((Bp, 1), jnp.float32),
        grid=(Bp // BB,),
        in_specs=[
            spec3(W, K),   # mu_x
            spec3(W, K),   # mu_y
            spec3(W, K),   # 1/sigma_x
            spec3(W, K),   # 1/sigma_y
            spec3(W, K),   # log_softmax(pi) - log sx - log sy - log 2pi
            spec3(W, M),   # pos_x
            spec3(W, M),   # pos_y
            spec3(1, N),   # neg_x
            spec3(1, N),   # neg_y
        ],
        out_specs=pl.BlockSpec((BB, 1), lambda b: (b, 0)),
        compiler_params=pltpu.CompilerParams(
            dimension_semantics=("parallel",),
            vmem_limit_bytes=32 * 1024 * 1024,
        ),
    )(mu_x, mu_y, isg_x, isg_y, lognorm, pos_x, pos_y, neg_x, neg_y)
    return out[:B, 0]


def _reference(mu, sigma, pi, neg, target_is_wh, pos_full, waypoints_ix):
    """Pure-JAX mirror of the PyTorch forward (positive-targets path), for checking."""
    if target_is_wh:
        neg = jnp.flip(neg, -1)
        pos_full = jnp.flip(pos_full, -1)
    pos = pos_full[:, :, jnp.asarray(waypoints_ix), :]          # (B, M, W, 2)
    W = pos.shape[2]
    d = pos[:, :, :, None, :] - neg[:, None, None, :, :]        # (B, M, W, N, 2)
    dist = jnp.linalg.norm(d, axis=-1)                          # (B, M, W, N)
    dist = jnp.transpose(dist, (0, 2, 3, 1))                    # (B, W, N, M)
    min_dist = jnp.min(dist, axis=-1)                           # (B, W, N)
    weights = jax.nn.softmax(-min_dist, axis=-1)                # softmin
    t = neg[:, None, :, None, :]                                # (B, 1, N, 1, 2)
    mu_ = mu[:, :, None, :, :]                                  # (B, W, 1, K, 2)
    sg_ = sigma[:, :, None, :, :]
    comp = (-0.5 * ((t - mu_) / sg_) ** 2 - jnp.log(sg_)
            - 0.5 * jnp.log(2.0 * jnp.pi)).sum(-1)              # (B, W, N, K)
    logw = jax.nn.log_softmax(pi, axis=-1)[:, :, None, :]       # (B, W, 1, K)
    lp = jax.scipy.special.logsumexp(comp + logw, axis=-1)      # (B, W, N)
    return -(lp * weights).sum(axis=(1, 2)) / W


if __name__ == "__main__":
    key = jax.random.PRNGKey(0)

    def make_inputs(bs, M, T, K, N, W):
        ks = jax.random.split(key, 5)
        mu = jax.random.normal(ks[0], (bs, W, K, 2), jnp.float32)
        sigma = 0.5 + jax.nn.softplus(jax.random.normal(ks[1], (bs, W, K, 2), jnp.float32))
        pi = jax.random.normal(ks[2], (bs, W, K), jnp.float32)
        neg = jax.random.normal(ks[3], (bs, N, 2), jnp.float32)
        pos = jax.random.normal(ks[4], (bs, M, T, 2), jnp.float32)
        return mu, sigma, pi, neg, pos

    waypoints_ix = (0, 3, 6, 9)          # -> W = 4 waypoints
    W = len(waypoints_ix)

    # config 1: small batch (single grid step, no padding)
    # config 2: batch > block -> multi-step grid + batch padding path
    for bs in (2, 10):
        M, T, K, N = 3, 10, 5, 8
        mu, sigma, pi, neg, pos = make_inputs(bs, M, T, K, N, W)

        loss = mdn_loss_negative(mu, sigma, pi, neg,
                                 target_is_wh=True,
                                 positive_targets=pos,
                                 waypoints_ix=waypoints_ix,
                                 num_negatives_cap=-1)
        loss = jax.block_until_ready(loss)

        ref = _reference(mu, sigma, pi, neg, True, pos, waypoints_ix)
        assert loss.shape == (bs,)
        assert np.allclose(np.asarray(loss), np.asarray(ref),
                           rtol=5e-4, atol=5e-4), (bs, loss, ref)

    print("KERNEL_OK")
</pallas_src>

<mosaic_0001>
module attributes {stable_mosaic.version = 11 : i64} {
  func.func @_mdn_neg_kernel(%arg0: i32, %arg1: memref<2x4x5xf32, #tpu.memory_space<vmem>>, %arg2: memref<2x4x5xf32, #tpu.memory_space<vmem>>, %arg3: memref<2x4x5xf32, #tpu.memory_space<vmem>>, %arg4: memref<2x4x5xf32, #tpu.memory_space<vmem>>, %arg5: memref<2x4x5xf32, #tpu.memory_space<vmem>>, %arg6: memref<2x4x3xf32, #tpu.memory_space<vmem>>, %arg7: memref<2x4x3xf32, #tpu.memory_space<vmem>>, %arg8: memref<2x1x8xf32, #tpu.memory_space<vmem>>, %arg9: memref<2x1x8xf32, #tpu.memory_space<vmem>>, %arg10: memref<2x1xf32, #tpu.memory_space<vmem>>) attributes {dimension_semantics = [#tpu.dimension_semantics<parallel>], iteration_bounds = array<i64: 1>, scalar_prefetch = 0 : i64, scratch_operands = 0 : i64, tpu.core_type = #tpu.core_type<tc>, window_params = [{transform_indices = @transform_0, window_bounds = array<i64: 2, 4, 5>}, {transform_indices = @transform_1, window_bounds = array<i64: 2, 4, 5>}, {transform_indices = @transform_2, window_bounds = array<i64: 2, 4, 5>}, {transform_indices = @transform_3, window_bounds = array<i64: 2, 4, 5>}, {transform_indices = @transform_4, window_bounds = array<i64: 2, 4, 5>}, {transform_indices = @transform_5, window_bounds = array<i64: 2, 4, 3>}, {transform_indices = @transform_6, window_bounds = array<i64: 2, 4, 3>}, {transform_indices = @transform_7, window_bounds = array<i64: 2, 1, 8>}, {transform_indices = @transform_8, window_bounds = array<i64: 2, 1, 8>}, {transform_indices = @transform_9, window_bounds = array<i64: 2, 1>}]} {
    %c0 = arith.constant 0 : index
    %c0_0 = arith.constant 0 : index
    %c0_1 = arith.constant 0 : index
    %0 = vector.load %arg8[%c0, %c0_0, %c0_1] : memref<2x1x8xf32, #tpu.memory_space<vmem>>, vector<2x1x8xf32>
    %c0_2 = arith.constant 0 : index
    %c0_3 = arith.constant 0 : index
    %c0_4 = arith.constant 0 : index
    %1 = vector.load %arg9[%c0_2, %c0_3, %c0_4] : memref<2x1x8xf32, #tpu.memory_space<vmem>>, vector<2x1x8xf32>
    %c0_5 = arith.constant 0 : index
    %c0_6 = arith.constant 0 : index
    %c0_7 = arith.constant 0 : index
    %2 = vector.load %arg6[%c0_5, %c0_6, %c0_7] : memref<2x4x3xf32, #tpu.memory_space<vmem>>, vector<2x4x3xf32>
    %c0_8 = arith.constant 0 : index
    %c0_9 = arith.constant 0 : index
    %c0_10 = arith.constant 0 : index
    %3 = vector.load %arg7[%c0_8, %c0_9, %c0_10] : memref<2x4x3xf32, #tpu.memory_space<vmem>>, vector<2x4x3xf32>
    %4 = vector.extract_strided_slice %2 {offsets = [0, 0, 0], sizes = [2, 4, 1], strides = [1, 1, 1]} : vector<2x4x3xf32> to vector<2x4x1xf32>
    %5 = vector.broadcast %4 : vector<2x4x1xf32> to vector<2x4x8xf32>
    %6 = vector.broadcast %0 : vector<2x1x8xf32> to vector<2x4x8xf32>
    %7 = arith.subf %5, %6 : vector<2x4x8xf32>
    %8 = vector.extract_strided_slice %3 {offsets = [0, 0, 0], sizes = [2, 4, 1], strides = [1, 1, 1]} : vector<2x4x3xf32> to vector<2x4x1xf32>
    %9 = vector.broadcast %8 : vector<2x4x1xf32> to vector<2x4x8xf32>
    %10 = vector.broadcast %1 : vector<2x1x8xf32> to vector<2x4x8xf32>
    %11 = arith.subf %9, %10 : vector<2x4x8xf32>
    %12 = arith.mulf %7, %7 : vector<2x4x8xf32>
    %13 = arith.mulf %11, %11 : vector<2x4x8xf32>
    %14 = arith.addf %12, %13 : vector<2x4x8xf32>
    %15 = vector.extract_strided_slice %2 {offsets = [0, 0, 1], sizes = [2, 4, 1], strides = [1, 1, 1]} : vector<2x4x3xf32> to vector<2x4x1xf32>
    %16 = vector.broadcast %15 : vector<2x4x1xf32> to vector<2x4x8xf32>
    %17 = vector.broadcast %0 : vector<2x1x8xf32> to vector<2x4x8xf32>
    %18 = arith.subf %16, %17 : vector<2x4x8xf32>
    %19 = vector.extract_strided_slice %3 {offsets = [0, 0, 1], sizes = [2, 4, 1], strides = [1, 1, 1]} : vector<2x4x3xf32> to vector<2x4x1xf32>
    %20 = vector.broadcast %19 : vector<2x4x1xf32> to vector<2x4x8xf32>
    %21 = vector.broadcast %1 : vector<2x1x8xf32> to vector<2x4x8xf32>
    %22 = arith.subf %20, %21 : vector<2x4x8xf32>
    %23 = arith.mulf %18, %18 : vector<2x4x8xf32>
    %24 = arith.mulf %22, %22 : vector<2x4x8xf32>
    %25 = arith.addf %23, %24 : vector<2x4x8xf32>
    %26 = arith.minimumf %14, %25 : vector<2x4x8xf32>
    %27 = vector.extract_strided_slice %2 {offsets = [0, 0, 2], sizes = [2, 4, 1], strides = [1, 1, 1]} : vector<2x4x3xf32> to vector<2x4x1xf32>
    %28 = vector.broadcast %27 : vector<2x4x1xf32> to vector<2x4x8xf32>
    %29 = vector.broadcast %0 : vector<2x1x8xf32> to vector<2x4x8xf32>
    %30 = arith.subf %28, %29 : vector<2x4x8xf32>
    %31 = vector.extract_strided_slice %3 {offsets = [0, 0, 2], sizes = [2, 4, 1], strides = [1, 1, 1]} : vector<2x4x3xf32> to vector<2x4x1xf32>
    %32 = vector.broadcast %31 : vector<2x4x1xf32> to vector<2x4x8xf32>
    %33 = vector.broadcast %1 : vector<2x1x8xf32> to vector<2x4x8xf32>
    %34 = arith.subf %32, %33 : vector<2x4x8xf32>
    %35 = arith.mulf %30, %30 : vector<2x4x8xf32>
    %36 = arith.mulf %34, %34 : vector<2x4x8xf32>
    %37 = arith.addf %35, %36 : vector<2x4x8xf32>
    %38 = arith.minimumf %26, %37 : vector<2x4x8xf32>
    %39 = math.sqrt %38 : vector<2x4x8xf32>
    %cst = arith.constant 0.000000e+00 : f32
    %40 = vector.broadcast %cst : f32 to vector<2x4x8xf32>
    %41 = arith.subf %40, %39 : vector<2x4x8xf32>
    %cst_11 = arith.constant dense<0xFF800000> : vector<2x4xf32>
    %42 = vector.multi_reduction <maximumf>, %41, %cst_11 [2] : vector<2x4x8xf32> to vector<2x4xf32>
    %43 = vector.shape_cast %42 : vector<2x4xf32> to vector<2x4x1xf32>
    %44 = vector.broadcast %43 : vector<2x4x1xf32> to vector<2x4x8xf32>
    %45 = arith.subf %41, %44 : vector<2x4x8xf32>
    %46 = math.exp %45 : vector<2x4x8xf32>
    %cst_12 = arith.constant dense<0.000000e+00> : vector<2x4xf32>
    %47 = vector.multi_reduction <add>, %46, %cst_12 [2] : vector<2x4x8xf32> to vector<2x4xf32>
    %48 = vector.shape_cast %47 : vector<2x4xf32> to vector<2x4x1xf32>
    %49 = tpu.reciprocal %48 {approx = true} : vector<2x4x1xf32> -> vector<2x4x1xf32>
    %50 = arith.mulf %48, %49 : vector<2x4x1xf32>
    %cst_13 = arith.constant 2.000000e+00 : f32
    %51 = vector.broadcast %cst_13 : f32 to vector<2x4x1xf32>
    %52 = arith.subf %51, %50 : vector<2x4x1xf32>
    %53 = arith.mulf %49, %52 : vector<2x4x1xf32>
    %54 = vector.broadcast %53 : vector<2x4x1xf32> to vector<2x4x8xf32>
    %55 = arith.mulf %46, %54 : vector<2x4x8xf32>
    %c0_14 = arith.constant 0 : index
    %c0_15 = arith.constant 0 : index
    %c0_16 = arith.constant 0 : index
    %56 = vector.load %arg1[%c0_14, %c0_15, %c0_16] : memref<2x4x5xf32, #tpu.memory_space<vmem>>, vector<2x4x5xf32>
    %c0_17 = arith.constant 0 : index
    %c0_18 = arith.constant 0 : index
    %c0_19 = arith.constant 0 : index
    %57 = vector.load %arg2[%c0_17, %c0_18, %c0_19] : memref<2x4x5xf32, #tpu.memory_space<vmem>>, vector<2x4x5xf32>
    %c0_20 = arith.constant 0 : index
    %c0_21 = arith.constant 0 : index
    %c0_22 = arith.constant 0 : index
    %58 = vector.load %arg3[%c0_20, %c0_21, %c0_22] : memref<2x4x5xf32, #tpu.memory_space<vmem>>, vector<2x4x5xf32>
    %c0_23 = arith.constant 0 : index
    %c0_24 = arith.constant 0 : index
    %c0_25 = arith.constant 0 : index
    %59 = vector.load %arg4[%c0_23, %c0_24, %c0_25] : memref<2x4x5xf32, #tpu.memory_space<vmem>>, vector<2x4x5xf32>
    %c0_26 = arith.constant 0 : index
    %c0_27 = arith.constant 0 : index
    %c0_28 = arith.constant 0 : index
    %60 = vector.load %arg5[%c0_26, %c0_27, %c0_28] : memref<2x4x5xf32, #tpu.memory_space<vmem>>, vector<2x4x5xf32>
    %61 = vector.extract_strided_slice %56 {offsets = [0, 0, 0], sizes = [2, 4, 1], strides = [1, 1, 1]} : vector<2x4x5xf32> to vector<2x4x1xf32>
    %62 = vector.broadcast %0 : vector<2x1x8xf32> to vector<2x4x8xf32>
    %63 = vector.broadcast %61 : vector<2x4x1xf32> to vector<2x4x8xf32>
    %64 = arith.subf %62, %63 : vector<2x4x8xf32>
    %65 = vector.extract_strided_slice %58 {offsets = [0, 0, 0], sizes = [2, 4, 1], strides = [1, 1, 1]} : vector<2x4x5xf32> to vector<2x4x1xf32>
    %66 = vector.broadcast %65 : vector<2x4x1xf32> to vector<2x4x8xf32>
    %67 = arith.mulf %64, %66 : vector<2x4x8xf32>
    %68 = vector.extract_strided_slice %57 {offsets = [0, 0, 0], sizes = [2, 4, 1], strides = [1, 1, 1]} : vector<2x4x5xf32> to vector<2x4x1xf32>
    %69 = vector.broadcast %1 : vector<2x1x8xf32> to vector<2x4x8xf32>
    %70 = vector.broadcast %68 : vector<2x4x1xf32> to vector<2x4x8xf32>
    %71 = arith.subf %69, %70 : vector<2x4x8xf32>
    %72 = vector.extract_strided_slice %59 {offsets = [0, 0, 0], sizes = [2, 4, 1], strides = [1, 1, 1]} : vector<2x4x5xf32> to vector<2x4x1xf32>
    %73 = vector.broadcast %72 : vector<2x4x1xf32> to vector<2x4x8xf32>
    %74 = arith.mulf %71, %73 : vector<2x4x8xf32>
    %75 = vector.extract_strided_slice %60 {offsets = [0, 0, 0], sizes = [2, 4, 1], strides = [1, 1, 1]} : vector<2x4x5xf32> to vector<2x4x1xf32>
    %76 = arith.mulf %67, %67 : vector<2x4x8xf32>
    %77 = arith.mulf %74, %74 : vector<2x4x8xf32>
    %78 = arith.addf %76, %77 : vector<2x4x8xf32>
    %cst_29 = arith.constant 5.000000e-01 : f32
    %79 = vector.broadcast %cst_29 : f32 to vector<2x4x8xf32>
    %80 = arith.mulf %79, %78 : vector<2x4x8xf32>
    %81 = vector.broadcast %75 : vector<2x4x1xf32> to vector<2x4x8xf32>
    %82 = arith.subf %81, %80 : vector<2x4x8xf32>
    %83 = vector.extract_strided_slice %56 {offsets = [0, 0, 1], sizes = [2, 4, 1], strides = [1, 1, 1]} : vector<2x4x5xf32> to vector<2x4x1xf32>
    %84 = vector.broadcast %0 : vector<2x1x8xf32> to vector<2x4x8xf32>
    %85 = vector.broadcast %83 : vector<2x4x1xf32> to vector<2x4x8xf32>
    %86 = arith.subf %84, %85 : vector<2x4x8xf32>
    %87 = vector.extract_strided_slice %58 {offsets = [0, 0, 1], sizes = [2, 4, 1], strides = [1, 1, 1]} : vector<2x4x5xf32> to vector<2x4x1xf32>
    %88 = vector.broadcast %87 : vector<2x4x1xf32> to vector<2x4x8xf32>
    %89 = arith.mulf %86, %88 : vector<2x4x8xf32>
    %90 = vector.extract_strided_slice %57 {offsets = [0, 0, 1], sizes = [2, 4, 1], strides = [1, 1, 1]} : vector<2x4x5xf32> to vector<2x4x1xf32>
    %91 = vector.broadcast %1 : vector<2x1x8xf32> to vector<2x4x8xf32>
    %92 = vector.broadcast %90 : vector<2x4x1xf32> to vector<2x4x8xf32>
    %93 = arith.subf %91, %92 : vector<2x4x8xf32>
    %94 = vector.extract_strided_slice %59 {offsets = [0, 0, 1], sizes = [2, 4, 1], strides = [1, 1, 1]} : vector<2x4x5xf32> to vector<2x4x1xf32>
    %95 = vector.broadcast %94 : vector<2x4x1xf32> to vector<2x4x8xf32>
    %96 = arith.mulf %93, %95 : vector<2x4x8xf32>
    %97 = vector.extract_strided_slice %60 {offsets = [0, 0, 1], sizes = [2, 4, 1], strides = [1, 1, 1]} : vector<2x4x5xf32> to vector<2x4x1xf32>
    %98 = arith.mulf %89, %89 : vector<2x4x8xf32>
    %99 = arith.mulf %96, %96 : vector<2x4x8xf32>
    %100 = arith.addf %98, %99 : vector<2x4x8xf32>
    %cst_30 = arith.constant 5.000000e-01 : f32
    %101 = vector.broadcast %cst_30 : f32 to vector<2x4x8xf32>
    %102 = arith.mulf %101, %100 : vector<2x4x8xf32>
    %103 = vector.broadcast %97 : vector<2x4x1xf32> to vector<2x4x8xf32>
    %104 = arith.subf %103, %102 : vector<2x4x8xf32>
    %105 = arith.maximumf %82, %104 : vector<2x4x8xf32>
    %106 = vector.extract_strided_slice %56 {offsets = [0, 0, 2], sizes = [2, 4, 1], strides = [1, 1, 1]} : vector<2x4x5xf32> to vector<2x4x1xf32>
    %107 = vector.broadcast %0 : vector<2x1x8xf32> to vector<2x4x8xf32>
    %108 = vector.broadcast %106 : vector<2x4x1xf32> to vector<2x4x8xf32>
    %109 = arith.subf %107, %108 : vector<2x4x8xf32>
    %110 = vector.extract_strided_slice %58 {offsets = [0, 0, 2], sizes = [2, 4, 1], strides = [1, 1, 1]} : vector<2x4x5xf32> to vector<2x4x1xf32>
    %111 = vector.broadcast %110 : vector<2x4x1xf32> to vector<2x4x8xf32>
    %112 = arith.mulf %109, %111 : vector<2x4x8xf32>
    %113 = vector.extract_strided_slice %57 {offsets = [0, 0, 2], sizes = [2, 4, 1], strides = [1, 1, 1]} : vector<2x4x5xf32> to vector<2x4x1xf32>
    %114 = vector.broadcast %1 : vector<2x1x8xf32> to vector<2x4x8xf32>
    %115 = vector.broadcast %113 : vector<2x4x1xf32> to vector<2x4x8xf32>
    %116 = arith.subf %114, %115 : vector<2x4x8xf32>
    %117 = vector.extract_strided_slice %59 {offsets = [0, 0, 2], sizes = [2, 4, 1], strides = [1, 1, 1]} : vector<2x4x5xf32> to vector<2x4x1xf32>
    %118 = vector.broadcast %117 : vector<2x4x1xf32> to vector<2x4x8xf32>
    %119 = arith.mulf %116, %118 : vector<2x4x8xf32>
    %120 = vector.extract_strided_slice %60 {offsets = [0, 0, 2], sizes = [2, 4, 1], strides = [1, 1, 1]} : vector<2x4x5xf32> to vector<2x4x1xf32>
    %121 = arith.mulf %112, %112 : vector<2x4x8xf32>
    %122 = arith.mulf %119, %119 : vector<2x4x8xf32>
    %123 = arith.addf %121, %122 : vector<2x4x8xf32>
    %cst_31 = arith.constant 5.000000e-01 : f32
    %124 = vector.broadcast %cst_31 : f32 to vector<2x4x8xf32>
    %125 = arith.mulf %124, %123 : vector<2x4x8xf32>
    %126 = vector.broadcast %120 : vector<2x4x1xf32> to vector<2x4x8xf32>
    %127 = arith.subf %126, %125 : vector<2x4x8xf32>
    %128 = arith.maximumf %105, %127 : vector<2x4x8xf32>
    %129 = vector.extract_strided_slice %56 {offsets = [0, 0, 3], sizes = [2, 4, 1], strides = [1, 1, 1]} : vector<2x4x5xf32> to vector<2x4x1xf32>
    %130 = vector.broadcast %0 : vector<2x1x8xf32> to vector<2x4x8xf32>
    %131 = vector.broadcast %129 : vector<2x4x1xf32> to vector<2x4x8xf32>
    %132 = arith.subf %130, %131 : vector<2x4x8xf32>
    %133 = vector.extract_strided_slice %58 {offsets = [0, 0, 3], sizes = [2, 4, 1], strides = [1, 1, 1]} : vector<2x4x5xf32> to vector<2x4x1xf32>
    %134 = vector.broadcast %133 : vector<2x4x1xf32> to vector<2x4x8xf32>
    %135 = arith.mulf %132, %134 : vector<2x4x8xf32>
    %136 = vector.extract_strided_slice %57 {offsets = [0, 0, 3], sizes = [2, 4, 1], strides = [1, 1, 1]} : vector<2x4x5xf32> to vector<2x4x1xf32>
    %137 = vector.broadcast %1 : vector<2x1x8xf32> to vector<2x4x8xf32>
    %138 = vector.broadcast %136 : vector<2x4x1xf32> to vector<2x4x8xf32>
    %139 = arith.subf %137, %138 : vector<2x4x8xf32>
    %140 = vector.extract_strided_slice %59 {offsets = [0, 0, 3], sizes = [2, 4, 1], strides = [1, 1, 1]} : vector<2x4x5xf32> to vector<2x4x1xf32>
    %141 = vector.broadcast %140 : vector<2x4x1xf32> to vector<2x4x8xf32>
    %142 = arith.mulf %139, %141 : vector<2x4x8xf32>
    %143 = vector.extract_strided_slice %60 {offsets = [0, 0, 3], sizes = [2, 4, 1], strides = [1, 1, 1]} : vector<2x4x5xf32> to vector<2x4x1xf32>
    %144 = arith.mulf %135, %135 : vector<2x4x8xf32>
    %145 = arith.mulf %142, %142 : vector<2x4x8xf32>
    %146 = arith.addf %144, %145 : vector<2x4x8xf32>
    %cst_32 = arith.constant 5.000000e-01 : f32
    %147 = vector.broadcast %cst_32 : f32 to vector<2x4x8xf32>
    %148 = arith.mulf %147, %146 : vector<2x4x8xf32>
    %149 = vector.broadcast %143 : vector<2x4x1xf32> to vector<2x4x8xf32>
    %150 = arith.subf %149, %148 : vector<2x4x8xf32>
    %151 = arith.maximumf %128, %150 : vector<2x4x8xf32>
    %152 = vector.extract_strided_slice %56 {offsets = [0, 0, 4], sizes = [2, 4, 1], strides = [1, 1, 1]} : vector<2x4x5xf32> to vector<2x4x1xf32>
    %153 = vector.broadcast %0 : vector<2x1x8xf32> to vector<2x4x8xf32>
    %154 = vector.broadcast %152 : vector<2x4x1xf32> to vector<2x4x8xf32>
    %155 = arith.subf %153, %154 : vector<2x4x8xf32>
    %156 = vector.extract_strided_slice %58 {offsets = [0, 0, 4], sizes = [2, 4, 1], strides = [1, 1, 1]} : vector<2x4x5xf32> to vector<2x4x1xf32>
    %157 = vector.broadcast %156 : vector<2x4x1xf32> to vector<2x4x8xf32>
    %158 = arith.mulf %155, %157 : vector<2x4x8xf32>
    %159 = vector.extract_strided_slice %57 {offsets = [0, 0, 4], sizes = [2, 4, 1], strides = [1, 1, 1]} : vector<2x4x5xf32> to vector<2x4x1xf32>
    %160 = vector.broadcast %1 : vector<2x1x8xf32> to vector<2x4x8xf32>
    %161 = vector.broadcast %159 : vector<2x4x1xf32> to vector<2x4x8xf32>
    %162 = arith.subf %160, %161 : vector<2x4x8xf32>
    %163 = vector.extract_strided_slice %59 {offsets = [0, 0, 4], sizes = [2, 4, 1], strides = [1, 1, 1]} : vector<2x4x5xf32> to vector<2x4x1xf32>
    %164 = vector.broadcast %163 : vector<2x4x1xf32> to vector<2x4x8xf32>
    %165 = arith.mulf %162, %164 : vector<2x4x8xf32>
    %166 = vector.extract_strided_slice %60 {offsets = [0, 0, 4], sizes = [2, 4, 1], strides = [1, 1, 1]} : vector<2x4x5xf32> to vector<2x4x1xf32>
    %167 = arith.mulf %158, %158 : vector<2x4x8xf32>
    %168 = arith.mulf %165, %165 : vector<2x4x8xf32>
    %169 = arith.addf %167, %168 : vector<2x4x8xf32>
    %cst_33 = arith.constant 5.000000e-01 : f32
    %170 = vector.broadcast %cst_33 : f32 to vector<2x4x8xf32>
    %171 = arith.mulf %170, %169 : vector<2x4x8xf32>
    %172 = vector.broadcast %166 : vector<2x4x1xf32> to vector<2x4x8xf32>
    %173 = arith.subf %172, %171 : vector<2x4x8xf32>
    %174 = arith.maximumf %151, %173 : vector<2x4x8xf32>
    %175 = vector.extract_strided_slice %56 {offsets = [0, 0, 0], sizes = [2, 4, 1], strides = [1, 1, 1]} : vector<2x4x5xf32> to vector<2x4x1xf32>
    %176 = vector.broadcast %0 : vector<2x1x8xf32> to vector<2x4x8xf32>
    %177 = vector.broadcast %175 : vector<2x4x1xf32> to vector<2x4x8xf32>
    %178 = arith.subf %176, %177 : vector<2x4x8xf32>
    %179 = vector.extract_strided_slice %58 {offsets = [0, 0, 0], sizes = [2, 4, 1], strides = [1, 1, 1]} : vector<2x4x5xf32> to vector<2x4x1xf32>
    %180 = vector.broadcast %179 : vector<2x4x1xf32> to vector<2x4x8xf32>
    %181 = arith.mulf %178, %180 : vector<2x4x8xf32>
    %182 = vector.extract_strided_slice %57 {offsets = [0, 0, 0], sizes = [2, 4, 1], strides = [1, 1, 1]} : vector<2x4x5xf32> to vector<2x4x1xf32>
    %183 = vector.broadcast %1 : vector<2x1x8xf32> to vector<2x4x8xf32>
    %184 = vector.broadcast %182 : vector<2x4x1xf32> to vector<2x4x8xf32>
    %185 = arith.subf %183, %184 : vector<2x4x8xf32>
    %186 = vector.extract_strided_slice %59 {offsets = [0, 0, 0], sizes = [2, 4, 1], strides = [1, 1, 1]} : vector<2x4x5xf32> to vector<2x4x1xf32>
    %187 = vector.broadcast %186 : vector<2x4x1xf32> to vector<2x4x8xf32>
    %188 = arith.mulf %185, %187 : vector<2x4x8xf32>
    %189 = vector.extract_strided_slice %60 {offsets = [0, 0, 0], sizes = [2, 4, 1], strides = [1, 1, 1]} : vector<2x4x5xf32> to vector<2x4x1xf32>
    %190 = arith.mulf %181, %181 : vector<2x4x8xf32>
    %191 = arith.mulf %188, %188 : vector<2x4x8xf32>
    %192 = arith.addf %190, %191 : vector<2x4x8xf32>
    %cst_34 = arith.constant 5.000000e-01 : f32
    %193 = vector.broadcast %cst_34 : f32 to vector<2x4x8xf32>
    %194 = arith.mulf %193, %192 : vector<2x4x8xf32>
    %195 = vector.broadcast %189 : vector<2x4x1xf32> to vector<2x4x8xf32>
    %196 = arith.subf %195, %194 : vector<2x4x8xf32>
    %197 = arith.subf %196, %174 : vector<2x4x8xf32>
    %198 = math.exp %197 : vector<2x4x8xf32>
    %199 = vector.extract_strided_slice %56 {offsets = [0, 0, 1], sizes = [2, 4, 1], strides = [1, 1, 1]} : vector<2x4x5xf32> to vector<2x4x1xf32>
    %200 = vector.broadcast %0 : vector<2x1x8xf32> to vector<2x4x8xf32>
    %201 = vector.broadcast %199 : vector<2x4x1xf32> to vector<2x4x8xf32>
    %202 = arith.subf %200, %201 : vector<2x4x8xf32>
    %203 = vector.extract_strided_slice %58 {offsets = [0, 0, 1], sizes = [2, 4, 1], strides = [1, 1, 1]} : vector<2x4x5xf32> to vector<2x4x1xf32>
    %204 = vector.broadcast %203 : vector<2x4x1xf32> to vector<2x4x8xf32>
    %205 = arith.mulf %202, %204 : vector<2x4x8xf32>
    %206 = vector.extract_strided_slice %57 {offsets = [0, 0, 1], sizes = [2, 4, 1], strides = [1, 1, 1]} : vector<2x4x5xf32> to vector<2x4x1xf32>
    %207 = vector.broadcast %1 : vector<2x1x8xf32> to vector<2x4x8xf32>
    %208 = vector.broadcast %206 : vector<2x4x1xf32> to vector<2x4x8xf32>
    %209 = arith.subf %207, %208 : vector<2x4x8xf32>
    %210 = vector.extract_strided_slice %59 {offsets = [0, 0, 1], sizes = [2, 4, 1], strides = [1, 1, 1]} : vector<2x4x5xf32> to vector<2x4x1xf32>
    %211 = vector.broadcast %210 : vector<2x4x1xf32> to vector<2x4x8xf32>
    %212 = arith.mulf %209, %211 : vector<2x4x8xf32>
    %213 = vector.extract_strided_slice %60 {offsets = [0, 0, 1], sizes = [2, 4, 1], strides = [1, 1, 1]} : vector<2x4x5xf32> to vector<2x4x1xf32>
    %214 = arith.mulf %205, %205 : vector<2x4x8xf32>
    %215 = arith.mulf %212, %212 : vector<2x4x8xf32>
    %216 = arith.addf %214, %215 : vector<2x4x8xf32>
    %cst_35 = arith.constant 5.000000e-01 : f32
    %217 = vector.broadcast %cst_35 : f32 to vector<2x4x8xf32>
    %218 = arith.mulf %217, %216 : vector<2x4x8xf32>
    %219 = vector.broadcast %213 : vector<2x4x1xf32> to vector<2x4x8xf32>
    %220 = arith.subf %219, %218 : vector<2x4x8xf32>
    %221 = arith.subf %220, %174 : vector<2x4x8xf32>
    %222 = math.exp %221 : vector<2x4x8xf32>
    %223 = arith.addf %198, %222 : vector<2x4x8xf32>
    %224 = vector.extract_strided_slice %56 {offsets = [0, 0, 2], sizes = [2, 4, 1], strides = [1, 1, 1]} : vector<2x4x5xf32> to vector<2x4x1xf32>
    %225 = vector.broadcast %0 : vector<2x1x8xf32> to vector<2x4x8xf32>
    %226 = vector.broadcast %224 : vector<2x4x1xf32> to vector<2x4x8xf32>
    %227 = arith.subf %225, %226 : vector<2x4x8xf32>
    %228 = vector.extract_strided_slice %58 {offsets = [0, 0, 2], sizes = [2, 4, 1], strides = [1, 1, 1]} : vector<2x4x5xf32> to vector<2x4x1xf32>
    %229 = vector.broadcast %228 : vector<2x4x1xf32> to vector<2x4x8xf32>
    %230 = arith.mulf %227, %229 : vector<2x4x8xf32>
    %231 = vector.extract_strided_slice %57 {offsets = [0, 0, 2], sizes = [2, 4, 1], strides = [1, 1, 1]} : vector<2x4x5xf32> to vector<2x4x1xf32>
    %232 = vector.broadcast %1 : vector<2x1x8xf32> to vector<2x4x8xf32>
    %233 = vector.broadcast %231 : vector<2x4x1xf32> to vector<2x4x8xf32>
    %234 = arith.subf %232, %233 : vector<2x4x8xf32>
    %235 = vector.extract_strided_slice %59 {offsets = [0, 0, 2], sizes = [2, 4, 1], strides = [1, 1, 1]} : vector<2x4x5xf32> to vector<2x4x1xf32>
    %236 = vector.broadcast %235 : vector<2x4x1xf32> to vector<2x4x8xf32>
    %237 = arith.mulf %234, %236 : vector<2x4x8xf32>
    %238 = vector.extract_strided_slice %60 {offsets = [0, 0, 2], sizes = [2, 4, 1], strides = [1, 1, 1]} : vector<2x4x5xf32> to vector<2x4x1xf32>
    %239 = arith.mulf %230, %230 : vector<2x4x8xf32>
    %240 = arith.mulf %237, %237 : vector<2x4x8xf32>
    %241 = arith.addf %239, %240 : vector<2x4x8xf32>
    %cst_36 = arith.constant 5.000000e-01 : f32
    %242 = vector.broadcast %cst_36 : f32 to vector<2x4x8xf32>
    %243 = arith.mulf %242, %241 : vector<2x4x8xf32>
    %244 = vector.broadcast %238 : vector<2x4x1xf32> to vector<2x4x8xf32>
    %245 = arith.subf %244, %243 : vector<2x4x8xf32>
    %246 = arith.subf %245, %174 : vector<2x4x8xf32>
    %247 = math.exp %246 : vector<2x4x8xf32>
    %248 = arith.addf %223, %247 : vector<2x4x8xf32>
    %249 = vector.extract_strided_slice %56 {offsets = [0, 0, 3], sizes = [2, 4, 1], strides = [1, 1, 1]} : vector<2x4x5xf32> to vector<2x4x1xf32>
    %250 = vector.broadcast %0 : vector<2x1x8xf32> to vector<2x4x8xf32>
    %251 = vector.broadcast %249 : vector<2x4x1xf32> to vector<2x4x8xf32>
    %252 = arith.subf %250, %251 : vector<2x4x8xf32>
    %253 = vector.extract_strided_slice %58 {offsets = [0, 0, 3], sizes = [2, 4, 1], strides = [1, 1, 1]} : vector<2x4x5xf32> to vector<2x4x1xf32>
    %254 = vector.broadcast %253 : vector<2x4x1xf32> to vector<2x4x8xf32>
    %255 = arith.mulf %252, %254 : vector<2x4x8xf32>
    %256 = vector.extract_strided_slice %57 {offsets = [0, 0, 3], sizes = [2, 4, 1], strides = [1, 1, 1]} : vector<2x4x5xf32> to vector<2x4x1xf32>
    %257 = vector.broadcast %1 : vector<2x1x8xf32> to vector<2x4x8xf32>
    %258 = vector.broadcast %256 : vector<2x4x1xf32> to vector<2x4x8xf32>
    %259 = arith.subf %257, %258 : vector<2x4x8xf32>
    %260 = vector.extract_strided_slice %59 {offsets = [0, 0, 3], sizes = [2, 4, 1], strides = [1, 1, 1]} : vector<2x4x5xf32> to vector<2x4x1xf32>
    %261 = vector.broadcast %260 : vector<2x4x1xf32> to vector<2x4x8xf32>
    %262 = arith.mulf %259, %261 : vector<2x4x8xf32>
    %263 = vector.extract_strided_slice %60 {offsets = [0, 0, 3], sizes = [2, 4, 1], strides = [1, 1, 1]} : vector<2x4x5xf32> to vector<2x4x1xf32>
    %264 = arith.mulf %255, %255 : vector<2x4x8xf32>
    %265 = arith.mulf %262, %262 : vector<2x4x8xf32>
    %266 = arith.addf %264, %265 : vector<2x4x8xf32>
    %cst_37 = arith.constant 5.000000e-01 : f32
    %267 = vector.broadcast %cst_37 : f32 to vector<2x4x8xf32>
    %268 = arith.mulf %267, %266 : vector<2x4x8xf32>
    %269 = vector.broadcast %263 : vector<2x4x1xf32> to vector<2x4x8xf32>
    %270 = arith.subf %269, %268 : vector<2x4x8xf32>
    %271 = arith.subf %270, %174 : vector<2x4x8xf32>
    %272 = math.exp %271 : vector<2x4x8xf32>
    %273 = arith.addf %248, %272 : vector<2x4x8xf32>
    %274 = vector.extract_strided_slice %56 {offsets = [0, 0, 4], sizes = [2, 4, 1], strides = [1, 1, 1]} : vector<2x4x5xf32> to vector<2x4x1xf32>
    %275 = vector.broadcast %0 : vector<2x1x8xf32> to vector<2x4x8xf32>
    %276 = vector.broadcast %274 : vector<2x4x1xf32> to vector<2x4x8xf32>
    %277 = arith.subf %275, %276 : vector<2x4x8xf32>
    %278 = vector.extract_strided_slice %58 {offsets = [0, 0, 4], sizes = [2, 4, 1], strides = [1, 1, 1]} : vector<2x4x5xf32> to vector<2x4x1xf32>
    %279 = vector.broadcast %278 : vector<2x4x1xf32> to vector<2x4x8xf32>
    %280 = arith.mulf %277, %279 : vector<2x4x8xf32>
    %281 = vector.extract_strided_slice %57 {offsets = [0, 0, 4], sizes = [2, 4, 1], strides = [1, 1, 1]} : vector<2x4x5xf32> to vector<2x4x1xf32>
    %282 = vector.broadcast %1 : vector<2x1x8xf32> to vector<2x4x8xf32>
    %283 = vector.broadcast %281 : vector<2x4x1xf32> to vector<2x4x8xf32>
    %284 = arith.subf %282, %283 : vector<2x4x8xf32>
    %285 = vector.extract_strided_slice %59 {offsets = [0, 0, 4], sizes = [2, 4, 1], strides = [1, 1, 1]} : vector<2x4x5xf32> to vector<2x4x1xf32>
    %286 = vector.broadcast %285 : vector<2x4x1xf32> to vector<2x4x8xf32>
    %287 = arith.mulf %284, %286 : vector<2x4x8xf32>
    %288 = vector.extract_strided_slice %60 {offsets = [0, 0, 4], sizes = [2, 4, 1], strides = [1, 1, 1]} : vector<2x4x5xf32> to vector<2x4x1xf32>
    %289 = arith.mulf %280, %280 : vector<2x4x8xf32>
    %290 = arith.mulf %287, %287 : vector<2x4x8xf32>
    %291 = arith.addf %289, %290 : vector<2x4x8xf32>
    %cst_38 = arith.constant 5.000000e-01 : f32
    %292 = vector.broadcast %cst_38 : f32 to vector<2x4x8xf32>
    %293 = arith.mulf %292, %291 : vector<2x4x8xf32>
    %294 = vector.broadcast %288 : vector<2x4x1xf32> to vector<2x4x8xf32>
    %295 = arith.subf %294, %293 : vector<2x4x8xf32>
    %296 = arith.subf %295, %174 : vector<2x4x8xf32>
    %297 = math.exp %296 : vector<2x4x8xf32>
    %298 = arith.addf %273, %297 : vector<2x4x8xf32>
    %299 = math.log %298 : vector<2x4x8xf32>
    %300 = arith.addf %299, %174 : vector<2x4x8xf32>
    %301 = arith.mulf %300, %55 : vector<2x4x8xf32>
    %cst_39 = arith.constant dense<0.000000e+00> : vector<2x4xf32>
    %302 = vector.multi_reduction <add>, %301, %cst_39 [2] : vector<2x4x8xf32> to vector<2x4xf32>
    %303 = vector.shape_cast %302 : vector<2x4xf32> to vector<2x4x1xf32>
    %cst_40 = arith.constant dense<0.000000e+00> : vector<2x1xf32>
    %304 = vector.multi_reduction <add>, %303, %cst_40 [1] : vector<2x4x1xf32> to vector<2x1xf32>
    %cst_41 = arith.constant 0.000000e+00 : f32
    %305 = vector.broadcast %cst_41 : f32 to vector<2x1xf32>
    %306 = arith.subf %305, %304 : vector<2x1xf32>
    %cst_42 = arith.constant 2.500000e-01 : f32
    %307 = vector.broadcast %cst_42 : f32 to vector<2x1xf32>
    %308 = arith.mulf %306, %307 : vector<2x1xf32>
    %c0_43 = arith.constant 0 : index
    %c0_44 = arith.constant 0 : index
    %309 = vector.load %arg10[%c0_43, %c0_44] : memref<2x1xf32, #tpu.memory_space<vmem>>, vector<2x1xf32>
    tpu.vector_store %arg10[%c0_43, %c0_44], %308 {strides = array<i32>} : memref<2x1xf32, #tpu.memory_space<vmem>>, vector<2x1xf32>,
    return
  }
  func.func @transform_0(%arg0: i32) -> (i32, i32, i32) {
    %c0_i32 = arith.constant 0 : i32
    %c0_i32_0 = arith.constant 0 : i32
    %c0_i32_1 = arith.constant 0 : i32
    return %arg0, %c0_i32, %c0_i32_0 : i32, i32, i32
  }
  func.func @transform_1(%arg0: i32) -> (i32, i32, i32) {
    %c0_i32 = arith.constant 0 : i32
    %c0_i32_0 = arith.constant 0 : i32
    %c0_i32_1 = arith.constant 0 : i32
    return %arg0, %c0_i32, %c0_i32_0 : i32, i32, i32
  }
  func.func @transform_2(%arg0: i32) -> (i32, i32, i32) {
    %c0_i32 = arith.constant 0 : i32
    %c0_i32_0 = arith.constant 0 : i32
    %c0_i32_1 = arith.constant 0 : i32
    return %arg0, %c0_i32, %c0_i32_0 : i32, i32, i32
  }
  func.func @transform_3(%arg0: i32) -> (i32, i32, i32) {
    %c0_i32 = arith.constant 0 : i32
    %c0_i32_0 = arith.constant 0 : i32
    %c0_i32_1 = arith.constant 0 : i32
    return %arg0, %c0_i32, %c0_i32_0 : i32, i32, i32
  }
  func.func @transform_4(%arg0: i32) -> (i32, i32, i32) {
    %c0_i32 = arith.constant 0 : i32
    %c0_i32_0 = arith.constant 0 : i32
    %c0_i32_1 = arith.constant 0 : i32
    return %arg0, %c0_i32, %c0_i32_0 : i32, i32, i32
  }
  func.func @transform_5(%arg0: i32) -> (i32, i32, i32) {
    %c0_i32 = arith.constant 0 : i32
    %c0_i32_0 = arith.constant 0 : i32
    %c0_i32_1 = arith.constant 0 : i32
    return %arg0, %c0_i32, %c0_i32_0 : i32, i32, i32
  }
  func.func @transform_6(%arg0: i32) -> (i32, i32, i32) {
    %c0_i32 = arith.constant 0 : i32
    %c0_i32_0 = arith.constant 0 : i32
    %c0_i32_1 = arith.constant 0 : i32
    return %arg0, %c0_i32, %c0_i32_0 : i32, i32, i32
  }
  func.func @transform_7(%arg0: i32) -> (i32, i32, i32) {
    %c0_i32 = arith.constant 0 : i32
    %c0_i32_0 = arith.constant 0 : i32
    %c0_i32_1 = arith.constant 0 : i32
    return %arg0, %c0_i32, %c0_i32_0 : i32, i32, i32
  }
  func.func @transform_8(%arg0: i32) -> (i32, i32, i32) {
    %c0_i32 = arith.constant 0 : i32
    %c0_i32_0 = arith.constant 0 : i32
    %c0_i32_1 = arith.constant 0 : i32
    return %arg0, %c0_i32, %c0_i32_0 : i32, i32, i32
  }
  func.func @transform_9(%arg0: i32) -> (i32, i32) {
    %c0_i32 = arith.constant 0 : i32
    %c0_i32_0 = arith.constant 0 : i32
    return %arg0, %c0_i32 : i32, i32
  }
}

</mosaic_0001>

<llo_original>
// kernel: tpu_custom_call.1
$region0: #{tpu_custom_call.1}
  #allocation0 [shape = 'u32[]', space=smem, size = 0x4, offset = 0x4, fixed_abs, tag = 'smem constant byte address 0x4 - core index']
  #allocation1 [shape = 'u32[144,128]{1,0:T(1,128)}', space=vmem, size = 0x12000, scoped, tag = 'internal scratch']
  %s0 = inlined_call_operand.vmem [shape: f32[2,4,5], index: 0, kind: input, shape index: {}]
  %s1 = inlined_call_operand.vmem [shape: f32[2,4,5], index: 1, kind: input, shape index: {}]
  %s2 = inlined_call_operand.vmem [shape: f32[2,4,5], index: 2, kind: input, shape index: {}]
  %s3 = inlined_call_operand.vmem [shape: f32[2,4,5], index: 3, kind: input, shape index: {}]
  %s4 = inlined_call_operand.vmem [shape: f32[2,4,5], index: 4, kind: input, shape index: {}]
  %s5 = inlined_call_operand.vmem [shape: f32[2,4,3], index: 5, kind: input, shape index: {}]
  %s6 = inlined_call_operand.vmem [shape: f32[2,4,3], index: 6, kind: input, shape index: {}]
  %s7 = inlined_call_operand.vmem [shape: f32[2,1,8], index: 7, kind: input, shape index: {}]
  %s8 = inlined_call_operand.vmem [shape: f32[2,1,8], index: 8, kind: input, shape index: {}]
  %s9 = inlined_call_operand.vmem [shape: f32[2,1], index: 9, kind: output, shape index: {}]
  %s10 = sld [smem:[#allocation0]]
  $region46: #{tpu_custom_call.1} parent=0
    _
  %s12 = ssub.s32 1, %s10
  %s13 = scalar_select 0, %s12, %s10
  // Predicated region
  $region2: #{tpu_custom_call.1} parent=0 // pred_check
    _
  $region3: #{tpu_custom_call.1} parent=0 // pred_check_branch
    %15 = sbr.rel (0) target = $region5
  $region4: #{tpu_custom_call.1} parent=0 // pred_region
    _
  $region5: #{tpu_custom_call.1} parent=0 // pred_fallthru
    _
  // Predicated region
  $region6: #{tpu_custom_call.1} parent=0 // pred_check
    _
  $region7: #{tpu_custom_call.1} parent=0 // pred_check_branch
    %17 = sbr.rel (0) target = $region9
  $region8: #{tpu_custom_call.1} parent=0 // pred_region
    _
  $region9: #{tpu_custom_call.1} parent=0 // pred_fallthru
    _
  // Predicated region
  $region10: #{tpu_custom_call.1} parent=0 // pred_check
    _
  $region11: #{tpu_custom_call.1} parent=0 // pred_check_branch
    %19 = sbr.rel (0) target = $region13
  $region12: #{tpu_custom_call.1} parent=0 // pred_region
    _
  $region13: #{tpu_custom_call.1} parent=0 // pred_fallthru
    _
  // Predicated region
  $region14: #{tpu_custom_call.1} parent=0 // pred_check
    _
  $region15: #{tpu_custom_call.1} parent=0 // pred_check_branch
    %21 = sbr.rel (0) target = $region17
  $region16: #{tpu_custom_call.1} parent=0 // pred_region
    _
  $region17: #{tpu_custom_call.1} parent=0 // pred_fallthru
    _
  // Predicated region
  $region18: #{tpu_custom_call.1} parent=0 // pred_check
    _
  $region19: #{tpu_custom_call.1} parent=0 // pred_check_branch
    %23 = sbr.rel (0) target = $region21
  $region20: #{tpu_custom_call.1} parent=0 // pred_region
    _
  $region21: #{tpu_custom_call.1} parent=0 // pred_fallthru
    _
  // Predicated region
  $region22: #{tpu_custom_call.1} parent=0 // pred_check
    _
  $region23: #{tpu_custom_call.1} parent=0 // pred_check_branch
    %25 = sbr.rel (0) target = $region25
  $region24: #{tpu_custom_call.1} parent=0 // pred_region
    _
  $region25: #{tpu_custom_call.1} parent=0 // pred_fallthru
    _
  // Predicated region
  $region26: #{tpu_custom_call.1} parent=0 // pred_check
    _
  $region27: #{tpu_custom_call.1} parent=0 // pred_check_branch
    %27 = sbr.rel (0) target = $region29
  $region28: #{tpu_custom_call.1} parent=0 // pred_region
    _
  $region29: #{tpu_custom_call.1} parent=0 // pred_fallthru
    _
  // Predicated region
  $region30: #{tpu_custom_call.1} parent=0 // pred_check
    _
  $region31: #{tpu_custom_call.1} parent=0 // pred_check_branch
    %29 = sbr.rel (0) target = $region33
  $region32: #{tpu_custom_call.1} parent=0 // pred_region
    _
  $region33: #{tpu_custom_call.1} parent=0 // pred_fallthru
    _
  // Predicated region
  $region34: #{tpu_custom_call.1} parent=0 // pred_check
    _
  $region35: #{tpu_custom_call.1} parent=0 // pred_check_branch
    %31 = sbr.rel (0) target = $region37
  $region36: #{tpu_custom_call.1} parent=0 // pred_region
    _
  $region37: #{tpu_custom_call.1} parent=0 // pred_fallthru
    _
  %v32 = vld [vmem:[%s7] sm:$0x1]
  %v33 = vld [vmem:[%s7 + $0x1] sm:$0x1]
  %v34 = vld [vmem:[%s8] sm:$0x1]
  %v35 = vld [vmem:[%s8 + $0x1] sm:$0x1]
  %v36 = vld [vmem:[%s5] sm:$0xf]
  %v37 = vld [vmem:[%s5 + $0x4] sm:$0xf]
  %v38 = vld [vmem:[%s6] sm:$0xf]
  %v39 = vld [vmem:[%s6 + $0x4] sm:$0xf]
  %41 = vset.pattern.permute.xlu0 0
  %42 = vperm.xlu0 %41, %v36
  %v43 = vpop.permute.xlu0 %42
  %46 = vset.pattern.permute.xlu0 0
  %47 = vperm.xlu0 %46, %v37
  %v48 = vpop.permute.xlu0 %47
  %v52 = vlaneseq
  %v53 = vshrl.u32 %v52, 7
  %v54 = vsub.s32 0, %v53
  %v55 = vrot.slane %v32, %v54
  %v56 = vlaneseq
  %v57 = vshrl.u32 %v56, 7
  %v58 = vsub.s32 0, %v57
  %v59 = vrot.slane %v33, %v58
  %v62 = vsub.f32 %v43, %v55
  %v63 = vsub.f32 %v48, %v59
  %65 = vset.pattern.permute.xlu0 0
  %66 = vperm.xlu0 %65, %v38
  %v67 = vpop.permute.xlu0 %66
  %70 = vset.pattern.permute.xlu0 0
  %71 = vperm.xlu0 %70, %v39
  %v72 = vpop.permute.xlu0 %71
  %v76 = vlaneseq
  %v77 = vshrl.u32 %v76, 7
  %v78 = vsub.s32 0, %v77
  %v79 = vrot.slane %v34, %v78
  %v80 = vlaneseq
  %v81 = vshrl.u32 %v80, 7
  %v82 = vsub.s32 0, %v81
  %v83 = vrot.slane %v35, %v82
  %v86 = vsub.f32 %v67, %v79
  %v87 = vsub.f32 %v72, %v83
  %v88 = vmul.f32 %v62, %v62
  %v89 = vmul.f32 %v63, %v63
  %v90 = vmul.f32 %v86, %v86
  %v91 = vmul.f32 %v87, %v87
  %v92 = vadd.f32 %v88, %v90
  %v93 = vadd.f32 %v89, %v91
  %94 = vset.pattern.permute.xlu0 1
  %95 = vperm.xlu0 %94, %v36
  %v96 = vpop.permute.xlu0 %95
  %98 = vset.pattern.permute.xlu0 1
  %99 = vperm.xlu0 %98, %v37
  %v100 = vpop.permute.xlu0 %99
  %v102 = vsub.f32 %v96, %v55
  %v103 = vsub.f32 %v100, %v59
  %104 = vset.pattern.permute.xlu0 1
  %105 = vperm.xlu0 %104, %v38
  %v106 = vpop.permute.xlu0 %105
  %108 = vset.pattern.permute.xlu0 1
  %109 = vperm.xlu0 %108, %v39
  %v110 = vpop.permute.xlu0 %109
  %v112 = vsub.f32 %v106, %v79
  %v113 = vsub.f32 %v110, %v83
  %v114 = vmul.f32 %v102, %v102
  %v115 = vmul.f32 %v103, %v103
  %v116 = vmul.f32 %v112, %v112
  %v117 = vmul.f32 %v113, %v113
  %v118 = vadd.f32 %v114, %v116
  %v119 = vadd.f32 %v115, %v117
  %v120 = vmin.f32 %v92, %v118
  %v121 = vmin.f32 %v93, %v119
  %122 = vset.pattern.permute.xlu0 2
  %123 = vperm.xlu0 %122, %v36
  %v124 = vpop.permute.xlu0 %123
  %126 = vset.pattern.permute.xlu0 2
  %127 = vperm.xlu0 %126, %v37
  %v128 = vpop.permute.xlu0 %127
  %v130 = vsub.f32 %v124, %v55
  %v131 = vsub.f32 %v128, %v59
  %132 = vset.pattern.permute.xlu0 2
  %133 = vperm.xlu0 %132, %v38
  %v134 = vpop.permute.xlu0 %133
  %136 = vset.pattern.permute.xlu0 2
  %137 = vperm.xlu0 %136, %v39
  %v138 = vpop.permute.xlu0 %137
  %v140 = vsub.f32 %v134, %v79
  %v141 = vsub.f32 %v138, %v83
  %v142 = vmul.f32 %v130, %v130
  %v143 = vmul.f32 %v131, %v131
  %v144 = vmul.f32 %v140, %v140
  %v145 = vmul.f32 %v141, %v141
  %v146 = vadd.f32 %v142, %v144
  %v147 = vadd.f32 %v143, %v145
  %v148 = vmin.f32 %v120, %v146
  %v149 = vmin.f32 %v121, %v147
  %v150 = vrsqrt.pop %v148
  %v151 = vmul.f32 %v148, %v150
  %vm152 = vcmp.eq.f32.partialorder %v148, inf
  %v153 = vsel %vm152, %v148, %v151
  %vm154 = vcmp.eq.f32.partialorder %v148, 0.0
  %v155 = vand.u32 %v148, 2147483648
  %v156 = vsel %vm154, %v155, %v153
  %v157 = vrsqrt.pop %v149
  %v158 = vmul.f32 %v149, %v157
  %vm159 = vcmp.eq.f32.partialorder %v149, inf
  %v160 = vsel %vm159, %v149, %v158
  %vm161 = vcmp.eq.f32.partialorder %v149, 0.0
  %v162 = vand.u32 %v149, 2147483648
  %v163 = vsel %vm161, %v162, %v160
  %v164 = vsub.f32 0.0, %v156
  %v165 = vsub.f32 0.0, %v163
  %vm166 = vcmask 60416
  %v167 = vsel %vm166, %v164, -inf
  %168 = vmax.xlane.f32.xlu0 %v167
  %v169 = vpop.xlane.xlu0 %168
  %v170 = vsel %vm166, %v165, -inf
  %171 = vmax.xlane.f32.xlu0 %v170
  %v172 = vpop.xlane.xlu0 %171
  %v173 = vsub.f32 %v164, %v169
  %v174 = vsub.f32 %v165, %v172
  %v175 = vmul.f32 %v173, 1.442695
  %v176 = vpow.pop %v175
  %v177 = vmul.f32 %v174, 1.442695
  %v178 = vpow.pop %v177
  %v179 = vsel %vm166, %v176, 0.0
  %180 = vadd.xlane.f32.xlu0 %v179
  %v181 = vpop.xlane.xlu0 %180
  %v182 = vsel %vm166, %v178, 0.0
  %183 = vadd.xlane.f32.xlu0 %v182
  %v184 = vpop.xlane.xlu0 %183
  %v185 = vrcp.pop %v181
  %v186 = vrcp.pop %v184
  %v187 = vmul.f32 %v181, %v185
  %v188 = vmul.f32 %v184, %v186
  %v189 = vsub.f32 2.0, %v187
  %v190 = vsub.f32 2.0, %v188
  %v191 = vmul.f32 %v185, %v189
  %v192 = vmul.f32 %v186, %v190
  %v193 = vmul.f32 %v176, %v191
  %v194 = vmul.f32 %v178, %v192
  %v195 = vld [vmem:[%s0] sm:$0xf]
  %v196 = vld [vmem:[%s0 + $0x4] sm:$0xf]
  %v197 = vld [vmem:[%s1] sm:$0xf]
  %v198 = vld [vmem:[%s1 + $0x4] sm:$0xf]
  %v199 = vld [vmem:[%s2] sm:$0xf]
  %v200 = vld [vmem:[%s2 + $0x4] sm:$0xf]
  %v201 = vld [vmem:[%s3] sm:$0xf]
  %v202 = vld [vmem:[%s3 + $0x4] sm:$0xf]
  %v203 = vld [vmem:[%s4] sm:$0xf]
  %v204 = vld [vmem:[%s4 + $0x4] sm:$0xf]
  %206 = vset.pattern.permute.xlu0 0
  %207 = vperm.xlu0 %206, %v195
  %v208 = vpop.permute.xlu0 %207
  %211 = vset.pattern.permute.xlu0 0
  %212 = vperm.xlu0 %211, %v196
  %v213 = vpop.permute.xlu0 %212
  %v215 = vsub.f32 %v55, %v208
  %v216 = vsub.f32 %v59, %v213
  %218 = vset.pattern.permute.xlu0 0
  %219 = vperm.xlu0 %218, %v199
  %v220 = vpop.permute.xlu0 %219
  %223 = vset.pattern.permute.xlu0 0
  %224 = vperm.xlu0 %223, %v200
  %v225 = vpop.permute.xlu0 %224
  %v227 = vmul.f32 %v215, %v220
  %v228 = vmul.f32 %v216, %v225
  %230 = vset.pattern.permute.xlu0 0
  %231 = vperm.xlu0 %230, %v197
  %v232 = vpop.permute.xlu0 %231
  %235 = vset.pattern.permute.xlu0 0
  %236 = vperm.xlu0 %235, %v198
  %v237 = vpop.permute.xlu0 %236
  %v239 = vsub.f32 %v79, %v232
  %v240 = vsub.f32 %v83, %v237
  %242 = vset.pattern.permute.xlu0 0
  %243 = vperm.xlu0 %242, %v201
  %v244 = vpop.permute.xlu0 %243
  %247 = vset.pattern.permute.xlu0 0
  %248 = vperm.xlu0 %247, %v202
  %v249 = vpop.permute.xlu0 %248
  %v251 = vmul.f32 %v239, %v244
  %v252 = vmul.f32 %v240, %v249
  %v253 = vmul.f32 %v227, %v227
  %v254 = vmul.f32 %v228, %v228
  %v255 = vmul.f32 %v251, %v251
  %v256 = vmul.f32 %v252, %v252
  %v257 = vadd.f32 %v253, %v255
  %v258 = vadd.f32 %v254, %v256
  %v259 = vmul.f32 %v257, 0.5
  %v260 = vmul.f32 %v258, 0.5
  %262 = vset.pattern.permute.xlu0 0
  %263 = vperm.xlu0 %262, %v203
  %v264 = vpop.permute.xlu0 %263
  %267 = vset.pattern.permute.xlu0 0
  %268 = vperm.xlu0 %267, %v204
  %v269 = vpop.permute.xlu0 %268
  %v271 = vsub.f32 %v264, %v259
  %v272 = vsub.f32 %v269, %v260
  %273 = vset.pattern.permute.xlu0 1
  %274 = vperm.xlu0 %273, %v195
  %v275 = vpop.permute.xlu0 %274
  %277 = vset.pattern.permute.xlu0 1
  %278 = vperm.xlu0 %277, %v196
  %v279 = vpop.permute.xlu0 %278
  %v281 = vsub.f32 %v55, %v275
  %v282 = vsub.f32 %v59, %v279
  %283 = vset.pattern.permute.xlu0 1
  %284 = vperm.xlu0 %283, %v199
  %v285 = vpop.permute.xlu0 %284
  %287 = vset.pattern.permute.xlu0 1
  %288 = vperm.xlu0 %287, %v200
  %v289 = vpop.permute.xlu0 %288
  %v291 = vmul.f32 %v281, %v285
  %v292 = vmul.f32 %v282, %v289
  %293 = vset.pattern.permute.xlu0 1
  %294 = vperm.xlu0 %293, %v197
  %v295 = vpop.permute.xlu0 %294
  %297 = vset.pattern.permute.xlu0 1
  %298 = vperm.xlu0 %297, %v198
  %v299 = vpop.permute.xlu0 %298
  %v301 = vsub.f32 %v79, %v295
  %v302 = vsub.f32 %v83, %v299
  %303 = vset.pattern.permute.xlu0 1
  %304 = vperm.xlu0 %303, %v201
  %v305 = vpop.permute.xlu0 %304
  %307 = vset.pattern.permute.xlu0 1
  %308 = vperm.xlu0 %307, %v202
  %v309 = vpop.permute.xlu0 %308
  %v311 = vmul.f32 %v301, %v305
  %v312 = vmul.f32 %v302, %v309
  %v313 = vmul.f32 %v291, %v291
  %v314 = vmul.f32 %v292, %v292
  %v315 = vmul.f32 %v311, %v311
  %v316 = vmul.f32 %v312, %v312
  %v317 = vadd.f32 %v313, %v315
  %v318 = vadd.f32 %v314, %v316
  %v319 = vmul.f32 %v317, 0.5
  %v320 = vmul.f32 %v318, 0.5
  %321 = vset.pattern.permute.xlu0 1
  %322 = vperm.xlu0 %321, %v203
  %v323 = vpop.permute.xlu0 %322
  %325 = vset.pattern.permute.xlu0 1
  %326 = vperm.xlu0 %325, %v204
  %v327 = vpop.permute.xlu0 %326
  %v329 = vsub.f32 %v323, %v319
  %v330 = vsub.f32 %v327, %v320
  %v331 = vmax.f32 %v271, %v329
  %v332 = vmax.f32 %v272, %v330
  %333 = vset.pattern.permute.xlu0 2
  %334 = vperm.xlu0 %333, %v195
  %v335 = vpop.permute.xlu0 %334
  %337 = vset.pattern.permute.xlu0 2
  %338 = vperm.xlu0 %337, %v196
  %v339 = vpop.permute.xlu0 %338
  %v341 = vsub.f32 %v55, %v335
  %v342 = vsub.f32 %v59, %v339
  %343 = vset.pattern.permute.xlu0 2
  %344 = vperm.xlu0 %343, %v199
  %v345 = vpop.permute.xlu0 %344
  %347 = vset.pattern.permute.xlu0 2
  %348 = vperm.xlu0 %347, %v200
  %v349 = vpop.permute.xlu0 %348
  %v351 = vmul.f32 %v341, %v345
  %v352 = vmul.f32 %v342, %v349
  %353 = vset.pattern.permute.xlu0 2
  %354 = vperm.xlu0 %353, %v197
  %v355 = vpop.permute.xlu0 %354
  %357 = vset.pattern.permute.xlu0 2
  %358 = vperm.xlu0 %357, %v198
  %v359 = vpop.permute.xlu0 %358
  %v361 = vsub.f32 %v79, %v355
  %v362 = vsub.f32 %v83, %v359
  %363 = vset.pattern.permute.xlu0 2
  %364 = vperm.xlu0 %363, %v201
  %v365 = vpop.permute.xlu0 %364
  %367 = vset.pattern.permute.xlu0 2
  %368 = vperm.xlu0 %367, %v202
  %v369 = vpop.permute.xlu0 %368
  %v371 = vmul.f32 %v361, %v365
  %v372 = vmul.f32 %v362, %v369
  %v373 = vmul.f32 %v351, %v351
  %v374 = vmul.f32 %v352, %v352
  %v375 = vmul.f32 %v371, %v371
  %v376 = vmul.f32 %v372, %v372
  %v377 = vadd.f32 %v373, %v375
  %v378 = vadd.f32 %v374, %v376
  %v379 = vmul.f32 %v377, 0.5
  %v380 = vmul.f32 %v378, 0.5
  %381 = vset.pattern.permute.xlu0 2
  %382 = vperm.xlu0 %381, %v203
  %v383 = vpop.permute.xlu0 %382
  %385 = vset.pattern.permute.xlu0 2
  %386 = vperm.xlu0 %385, %v204
  %v387 = vpop.permute.xlu0 %386
  %v389 = vsub.f32 %v383, %v379
  %v390 = vsub.f32 %v387, %v380
  %v391 = vmax.f32 %v331, %v389
  %v392 = vmax.f32 %v332, %v390
  %393 = vset.pattern.permute.xlu0 3
  %394 = vperm.xlu0 %393, %v195
  %v395 = vpop.permute.xlu0 %394
  %397 = vset.pattern.permute.xlu0 3
  %398 = vperm.xlu0 %397, %v196
  %v399 = vpop.permute.xlu0 %398
  %v401 = vsub.f32 %v55, %v395
  %v402 = vsub.f32 %v59, %v399
  %403 = vset.pattern.permute.xlu0 3
  %404 = vperm.xlu0 %403, %v199
  %v405 = vpop.permute.xlu0 %404
  %407 = vset.pattern.permute.xlu0 3
  %408 = vperm.xlu0 %407, %v200
  %v409 = vpop.permute.xlu0 %408
  %v411 = vmul.f32 %v401, %v405
  %v412 = vmul.f32 %v402, %v409
  %413 = vset.pattern.permute.xlu0 3
  %414 = vperm.xlu0 %413, %v197
  %v415 = vpop.permute.xlu0 %414
  %417 = vset.pattern.permute.xlu0 3
  %418 = vperm.xlu0 %417, %v198
  %v419 = vpop.permute.xlu0 %418
  %v421 = vsub.f32 %v79, %v415
  %v422 = vsub.f32 %v83, %v419
  %423 = vset.pattern.permute.xlu0 3
  %424 = vperm.xlu0 %423, %v201
  %v425 = vpop.permute.xlu0 %424
  %427 = vset.pattern.permute.xlu0 3
  %428 = vperm.xlu0 %427, %v202
  %v429 = vpop.permute.xlu0 %428
  %v431 = vmul.f32 %v421, %v425
  %v432 = vmul.f32 %v422, %v429
  %v433 = vmul.f32 %v411, %v411
  %v434 = vmul.f32 %v412, %v412
  %v435 = vmul.f32 %v431, %v431
  %v436 = vmul.f32 %v432, %v432
  %v437 = vadd.f32 %v433, %v435
  %v438 = vadd.f32 %v434, %v436
  %v439 = vmul.f32 %v437, 0.5
  %v440 = vmul.f32 %v438, 0.5
  %441 = vset.pattern.permute.xlu0 3
  %442 = vperm.xlu0 %441, %v203
  %v443 = vpop.permute.xlu0 %442
  %445 = vset.pattern.permute.xlu0 3
  %446 = vperm.xlu0 %445, %v204
  %v447 = vpop.permute.xlu0 %446
  %v449 = vsub.f32 %v443, %v439
  %v450 = vsub.f32 %v447, %v440
  %v451 = vmax.f32 %v391, %v449
  %v452 = vmax.f32 %v392, %v450
  %453 = vset.pattern.permute.xlu0 4
  %454 = vperm.xlu0 %453, %v195
  %v455 = vpop.permute.xlu0 %454
  %457 = vset.pattern.permute.xlu0 4
  %458 = vperm.xlu0 %457, %v196
  %v459 = vpop.permute.xlu0 %458
  %v461 = vsub.f32 %v55, %v455
  %v462 = vsub.f32 %v59, %v459
  %463 = vset.pattern.permute.xlu0 4
  %464 = vperm.xlu0 %463, %v199
  %v465 = vpop.permute.xlu0 %464
  %467 = vset.pattern.permute.xlu0 4
  %468 = vperm.xlu0 %467, %v200
  %v469 = vpop.permute.xlu0 %468
  %v471 = vmul.f32 %v461, %v465
  %v472 = vmul.f32 %v462, %v469
  %473 = vset.pattern.permute.xlu0 4
  %474 = vperm.xlu0 %473, %v197
  %v475 = vpop.permute.xlu0 %474
  %477 = vset.pattern.permute.xlu0 4
  %478 = vperm.xlu0 %477, %v198
  %v479 = vpop.permute.xlu0 %478
  %v481 = vsub.f32 %v79, %v475
  %v482 = vsub.f32 %v83, %v479
  %483 = vset.pattern.permute.xlu0 4
  %484 = vperm.xlu0 %483, %v201
  %v485 = vpop.permute.xlu0 %484
  %487 = vset.pattern.permute.xlu0 4
  %488 = vperm.xlu0 %487, %v202
  %v489 = vpop.permute.xlu0 %488
  %v491 = vmul.f32 %v481, %v485
  %v492 = vmul.f32 %v482, %v489
  %v493 = vmul.f32 %v471, %v471
  %v494 = vmul.f32 %v472, %v472
  %v495 = vmul.f32 %v491, %v491
  %v496 = vmul.f32 %v492, %v492
  %v497 = vadd.f32 %v493, %v495
  %v498 = vadd.f32 %v494, %v496
  %v499 = vmul.f32 %v497, 0.5
  %v500 = vmul.f32 %v498, 0.5
  %501 = vset.pattern.permute.xlu0 4
  %502 = vperm.xlu0 %501, %v203
  %v503 = vpop.permute.xlu0 %502
  %505 = vset.pattern.permute.xlu0 4
  %506 = vperm.xlu0 %505, %v204
  %v507 = vpop.permute.xlu0 %506
  %v509 = vsub.f32 %v503, %v499
  %v510 = vsub.f32 %v507, %v500
  %v511 = vmax.f32 %v451, %v509
  %v512 = vmax.f32 %v452, %v510
  %v513 = vsub.f32 %v271, %v511
  %v514 = vsub.f32 %v272, %v512
  %v515 = vmul.f32 %v513, 1.442695
  %v516 = vpow.pop %v515
  %v517 = vmul.f32 %v514, 1.442695
  %v518 = vpow.pop %v517
  %v519 = vsub.f32 %v329, %v511
  %v520 = vsub.f32 %v330, %v512
  %v521 = vmul.f32 %v519, 1.442695
  %v522 = vpow.pop %v521
  %v523 = vmul.f32 %v520, 1.442695
  %v524 = vpow.pop %v523
  %v525 = vadd.f32 %v516, %v522
  %v526 = vadd.f32 %v518, %v524
  %v527 = vsub.f32 %v389, %v511
  %v528 = vsub.f32 %v390, %v512
  %v529 = vmul.f32 %v527, 1.442695
  %v530 = vpow.pop %v529
  %v531 = vmul.f32 %v528, 1.442695
  %v532 = vpow.pop %v531
  %v533 = vadd.f32 %v525, %v530
  %v534 = vadd.f32 %v526, %v532
  %v535 = vsub.f32 %v449, %v511
  %v536 = vsub.f32 %v450, %v512
  %v537 = vmul.f32 %v535, 1.442695
  %v538 = vpow.pop %v537
  %v539 = vmul.f32 %v536, 1.442695
  %v540 = vpow.pop %v539
  %v541 = vadd.f32 %v533, %v538
  %v542 = vadd.f32 %v534, %v540
  %v543 = vsub.f32 %v509, %v511
  %v544 = vsub.f32 %v510, %v512
  %v545 = vmul.f32 %v543, 1.442695
  %v546 = vpow.pop %v545
  %v547 = vmul.f32 %v544, 1.442695
  %v548 = vpow.pop %v547
  %v549 = vadd.f32 %v541, %v546
  %v550 = vadd.f32 %v542, %v548
  %v551 = vlog2.pop %v549
  %v552 = vmul.f32 %v551, 0.6931472
  %v553 = vlog2.pop %v550
  %v554 = vmul.f32 %v553, 0.6931472
  %v555 = vadd.f32 %v552, %v511
  %v556 = vadd.f32 %v554, %v512
  %v557 = vmul.f32 %v555, %v193
  %v558 = vmul.f32 %v556, %v194
  %v559 = vsel %vm166, %v557, 0.0
  %560 = vadd.xlane.f32.xlu0 %v559
  %v561 = vpop.xlane.xlu0 %560
  %v562 = vsel %vm166, %v558, 0.0
  %563 = vadd.xlane.f32.xlu0 %v562
  %v564 = vpop.xlane.xlu0 %563
  %vm565 = vcmask 1043456
  %v566 = vsel %vm565, %v561, 0.0
  %v567 = vrot.slane %v566, 4
  %v568 = vadd.f32 %v566, %v567
  %v569 = vrot.slane %v568, 2
  %v570 = vadd.f32 %v568, %v569
  %v571 = vrot.slane %v570, 1
  %v572 = vadd.f32 %v570, %v571
  %v573 = vsel %vm565, %v564, 0.0
  %v574 = vrot.slane %v573, 4
  %v575 = vadd.f32 %v573, %v574
  %v576 = vrot.slane %v575, 2
  %v577 = vadd.f32 %v575, %v576
  %v578 = vrot.slane %v577, 1
  %v579 = vadd.f32 %v577, %v578
  %v580 = vsub.f32 0.0, %v572
  %v581 = vsub.f32 0.0, %v579
  %v582 = vmul.f32 %v580, 0.25
  %v583 = vmul.f32 %v581, 0.25
  %vm586 = vcmask 1041409
  %v587 = vsel %vm586, %v583, %v582
  %vm589 = vcmask 1024
  %590 = vst.msk [vmem:[%s9] sm:$0x3] %vm589, %v587
  // Predicated region
  $region38: #{tpu_custom_call.1} parent=0 // pred_check
    _
  $region39: #{tpu_custom_call.1} parent=0 // pred_check_branch
    %592 = sbr.rel (0) target = $region41
  $region40: #{tpu_custom_call.1} parent=0 // pred_region
    _
  $region41: #{tpu_custom_call.1} parent=0 // pred_fallthru
    _
  // Predicated region
  $region42: #{tpu_custom_call.1} parent=0 // pred_check
    _
  $region43: #{tpu_custom_call.1} parent=0 // pred_check_branch
    %594 = sbr.rel (0) target = $region45
  $region44: #{tpu_custom_call.1} parent=0 // pred_region
    _
  $region45: #{tpu_custom_call.1} parent=0 // pred_fallthru
    _

</llo_original>
